<compile_context>
chip_gen: v6e
topology: v6e:2x2x1
jax: 0.10.0
libtpu: 0.0.40
codegen_flags: <defaults>
</compile_context>

<pallas_src>
import functools

import jax
import jax.numpy as jnp
from jax import lax
from jax.experimental import pallas as pl
from jax.experimental.pallas import tpu as pltpu

DIM_IN = 1024
DIM_HID = 128
DIM_DISC = 3
DIM_CONTI = 2
HEAD_PAD = 128           # fused (disc|mu|var) head, zero-padded to a full lane width
VAR_LO = DIM_DISC + DIM_CONTI
VAR_HI = DIM_DISC + 2 * DIM_CONTI
BN_EPS = 1e-5
LRELU_SLOPE = 0.1
_FUSED_MAX_N = 1024      # single fused kernel whenever the batch fits one tile
_MAX_TM = 2048           # batch tile (rows) for the two-phase path
_VMEM_LIMIT = 32 << 20   # conservative; leaves headroom even on v7x (64 MiB/TC)


def _round_up(v, m):
    return (v + m - 1) // m * m


# ----------------------------------------------------------------------------
# Shared epilogue: BN (precomputed batch mean/var) + LeakyReLU(0.1) + fused
# lane-dense head matmul (+ bias) + exp on the var-head columns only.
# ----------------------------------------------------------------------------
def _bn_lrelu_heads(h_f32, mean, var, gamma, beta, bias, w_heads):
    scale = gamma * lax.rsqrt(var + BN_EPS)
    shift = beta - mean * scale
    hb = h_f32 * scale + shift
    y = jnp.where(hb >= 0, hb, LRELU_SLOPE * hb)
    z = jnp.dot(y, w_heads, preferred_element_type=jnp.float32) + bias
    col = lax.broadcasted_iota(jnp.int32, z.shape, 1)
    var_cols = (col >= VAR_LO) & (col < VAR_HI)
    return jnp.where(var_cols, jnp.exp(z), z)


# ----------------------------------------------------------------------------
# Fused single-kernel path (N <= _FUSED_MAX_N): conv + batch stats + BN +
# LeakyReLU + fused heads + var exp, one pallas_call, no intermediates in HBM.
# p_ref rows: 0=gamma, 1=beta, 2=fused head bias (padded).
# ----------------------------------------------------------------------------
def _fused_kernel(x_ref, wconv_ref, p_ref, wheads_ref, out_ref, *, batch_n):
    h = jnp.dot(x_ref[...].astype(jnp.bfloat16), wconv_ref[...],
                preferred_element_type=jnp.float32)
    inv_n = 1.0 / float(batch_n)
    mean = jnp.sum(h, axis=0, keepdims=True) * inv_n
    # One-pass variance (clamped); fine for roughly-centered activations.
    var = jnp.maximum(jnp.sum(h * h, axis=0, keepdims=True) * inv_n - mean * mean,
                      0.0)
    out_ref[...] = _bn_lrelu_heads(
        h, mean, var,
        p_ref[0:1, :DIM_HID], p_ref[1:2, :DIM_HID], p_ref[2:3, :],
        wheads_ref[...])


# ----------------------------------------------------------------------------
# Two-phase path, phase 1: pointwise conv per batch tile (bf16 MXU, f32 acc)
# + one-pass per-tile partial batch stats with tail-row masking (no jnp.pad).
# ----------------------------------------------------------------------------
def _conv_stats_kernel(x_ref, wconv_ref, h_ref, pstats_ref, *, batch_n, tile_m):
    i = pl.program_id(0)
    h = jnp.dot(x_ref[...].astype(jnp.bfloat16), wconv_ref[...],
                preferred_element_type=jnp.float32)
    h_ref[...] = h.astype(h_ref.dtype)          # bf16 inter-phase storage
    row = lax.broadcasted_iota(jnp.int32, h.shape, 0) + i * tile_m
    hv = jnp.where(row < batch_n, h, 0.0)       # mask tail rows of the last tile
    ssum = jnp.sum(hv, axis=0, keepdims=True)
    ssq = jnp.sum(hv * hv, axis=0, keepdims=True)
    pstats_ref[...] = jnp.concatenate([ssum, ssq], axis=0)   # one (2,128) store


# ----------------------------------------------------------------------------
# Two-phase path, phase 2: reduce partial stats + fold BN scale/shift fully
# in-kernel, BN + LeakyReLU + fused heads (+ bias) + var-head exp.
# p_ref rows: 0=gamma, 1=beta, 2=fused head bias (padded).
# ----------------------------------------------------------------------------
def _bn_heads_kernel(h_ref, pstats_ref, p_ref, wheads_ref, out_ref, *, batch_n):
    inv_n = 1.0 / float(batch_n)
    sums = jnp.sum(pstats_ref[...], axis=0)     # (2, 128): tiny cross-tile reduce
    mean = sums[0:1, :] * inv_n
    var = jnp.maximum(sums[1:2, :] * inv_n - mean * mean, 0.0)
    out_ref[...] = _bn_lrelu_heads(
        h_ref[...].astype(jnp.float32), mean, var,
        p_ref[0:1, :DIM_HID], p_ref[1:2, :DIM_HID], p_ref[2:3, :],
        wheads_ref[...])


def _forward_fused(x2d, packed):
    n = x2d.shape[0]
    kernel = functools.partial(_fused_kernel, batch_n=n)
    return pl.pallas_call(
        kernel,
        grid=(1,),
        in_specs=[
            pl.BlockSpec((n, DIM_IN), lambda i: (0, 0)),          # whole x
            pl.BlockSpec((DIM_IN, DIM_HID), lambda i: (0, 0)),    # w_conv (bf16)
            pl.BlockSpec((8, HEAD_PAD), lambda i: (0, 0)),        # gamma|beta|bias
            pl.BlockSpec((DIM_HID, HEAD_PAD), lambda i: (0, 0)),  # fused head weights
        ],
        out_specs=pl.BlockSpec((n, HEAD_PAD), lambda i: (0, 0)),
        out_shape=jax.ShapeDtypeStruct((n, HEAD_PAD), jnp.float32),
        compiler_params=pltpu.CompilerParams(
            dimension_semantics=("arbitrary",),
            vmem_limit_bytes=_VMEM_LIMIT),
        cost_estimate=pl.CostEstimate(
            flops=2 * n * DIM_IN * DIM_HID + 2 * n * DIM_HID * HEAD_PAD
                  + 8 * n * DIM_HID,
            transcendentals=n * HEAD_PAD,
            bytes_accessed=4 * n * DIM_IN + 2 * DIM_IN * DIM_HID
                           + 4 * DIM_HID * HEAD_PAD + 4 * 8 * HEAD_PAD
                           + 4 * n * HEAD_PAD),
    )(x2d, packed["w_conv_bf16"], packed["gbb"], packed["w_heads"])


def _forward_two_phase(x2d, packed):
    n = x2d.shape[0]
    # >= 2 grid steps (shards the "parallel" batch axis across v7x's two TCs);
    # tile rows multiple of 16 (bf16 h sublane packing).  No wrapper-side pad.
    tm = min(_MAX_TM, _round_up(pl.cdiv(n, 2), 16))
    nt = pl.cdiv(n, tm)

    conv_kernel = functools.partial(_conv_stats_kernel, batch_n=n, tile_m=tm)
    h, pstats = pl.pallas_call(
        conv_kernel,
        grid=(nt,),
        in_specs=[
            pl.BlockSpec((tm, DIM_IN), lambda i: (i, 0)),          # x tile
            pl.BlockSpec((DIM_IN, DIM_HID), lambda i: (0, 0)),     # w_conv (bf16)
        ],
        out_specs=(
            pl.BlockSpec((tm, DIM_HID), lambda i: (i, 0)),         # h tile (bf16)
            pl.BlockSpec((None, 2, DIM_HID), lambda i: (i, 0, 0)),  # per-tile stats
        ),
        out_shape=(
            jax.ShapeDtypeStruct((n, DIM_HID), jnp.bfloat16),
            jax.ShapeDtypeStruct((nt, 2, DIM_HID), jnp.float32),
        ),
        compiler_params=pltpu.CompilerParams(
            dimension_semantics=("parallel",),
            vmem_limit_bytes=_VMEM_LIMIT),
        cost_estimate=pl.CostEstimate(
            flops=2 * nt * tm * DIM_IN * DIM_HID + 4 * nt * tm * DIM_HID,
            transcendentals=0,
            bytes_accessed=4 * n * DIM_IN + 2 * DIM_IN * DIM_HID
                           + 2 * n * DIM_HID + 4 * nt * 2 * DIM_HID),
    )(x2d, packed["w_conv_bf16"])

    bn_kernel = functools.partial(_bn_heads_kernel, batch_n=n)
    out = pl.pallas_call(
        bn_kernel,
        grid=(nt,),
        in_specs=[
            pl.BlockSpec((tm, DIM_HID), lambda i: (i, 0)),         # h tile (bf16)
            pl.BlockSpec((nt, 2, DIM_HID), lambda i: (0, 0, 0)),   # all partial stats
            pl.BlockSpec((8, HEAD_PAD), lambda i: (0, 0)),         # gamma|beta|bias
            pl.BlockSpec((DIM_HID, HEAD_PAD), lambda i: (0, 0)),   # fused head weights
        ],
        out_specs=pl.BlockSpec((tm, HEAD_PAD), lambda i: (i, 0)),
        out_shape=jax.ShapeDtypeStruct((n, HEAD_PAD), jnp.float32),
        compiler_params=pltpu.CompilerParams(
            dimension_semantics=("parallel",),
            vmem_limit_bytes=_VMEM_LIMIT),
        cost_estimate=pl.CostEstimate(
            flops=2 * nt * tm * DIM_HID * HEAD_PAD + 10 * nt * tm * DIM_HID,
            transcendentals=nt * tm * HEAD_PAD,
            bytes_accessed=2 * n * DIM_HID + 4 * n * HEAD_PAD
                           + 4 * DIM_HID * HEAD_PAD + 4 * 8 * HEAD_PAD
                           + 4 * nt * 2 * DIM_HID),
    )(h, pstats, packed["gbb"], packed["w_heads"])
    return out


def _split_heads(out):
    disc = out[:, 0:DIM_DISC]
    mu = out[:, DIM_DISC:VAR_LO]
    var = out[:, VAR_LO:VAR_HI]        # exp already applied in-kernel
    # PyTorch .squeeze() on (N, k) with N > 1 is a no-op; keep 2-D outputs.
    return disc, mu, var


@jax.jit
def q_fc_forward(x_ncl, packed):
    """x_ncl: (N, 1024, 1) float32 (NCL, as PyTorch Conv1d expects)."""
    n, c, l = x_ncl.shape
    assert c == DIM_IN and l == 1, "Q_fc expects (N, 1024, 1) inputs"
    x2d = x_ncl.reshape(n, c)          # (batch, channels): channels on the lane axis
    if n <= _FUSED_MAX_N:
        out = _forward_fused(x2d, packed)
    else:
        out = _forward_two_phase(x2d, packed)
    return _split_heads(out)


@jax.jit
def _q_fc_forward_two_phase_for_test(x_ncl, packed):
    """Same forward, but forcing the tiled two-phase path (for testing)."""
    n, c, _ = x_ncl.shape
    return _split_heads(_forward_two_phase(x_ncl.reshape(n, c), packed))


def pack_params(params):
    """One-time packing of per-call-invariant parameters (hoisted out of the
    per-forward path per the perf review).  Call once, reuse every forward."""
    w_heads = jnp.zeros((DIM_HID, HEAD_PAD), jnp.float32)
    w_heads = w_heads.at[:, 0:DIM_DISC].set(params["w_disc"])
    w_heads = w_heads.at[:, DIM_DISC:VAR_LO].set(params["w_mu"])
    w_heads = w_heads.at[:, VAR_LO:VAR_HI].set(params["w_var"])

    b_heads = jnp.zeros((HEAD_PAD,), jnp.float32)
    b_heads = b_heads.at[0:DIM_DISC].set(params["b_disc"][0])
    b_heads = b_heads.at[DIM_DISC:VAR_LO].set(params["b_mu"][0])
    b_heads = b_heads.at[VAR_LO:VAR_HI].set(params["b_var"][0])

    gbb = jnp.zeros((8, HEAD_PAD), jnp.float32)
    gbb = gbb.at[0, :DIM_HID].set(params["gamma"][0])
    gbb = gbb.at[1, :DIM_HID].set(params["beta"][0])
    gbb = gbb.at[2].set(b_heads)

    return {
        "w_conv_bf16": params["w_conv"].astype(jnp.bfloat16),  # bf16 MXU operand
        "w_heads": w_heads,
        "gbb": gbb,
    }


def init_params(key):
    """Deterministic, PyTorch-shaped parameter init (weights stored transposed).
    w_conv is snapped to bf16-representable values so the in-kernel bf16 MXU
    path matches the f32 reference exactly."""
    k_conv, k_d, k_db, k_m, k_mb, k_v, k_vb = jax.random.split(key, 7)

    def uniform(k, shape, bound):
        return jax.random.uniform(k, shape, jnp.float32, -bound, bound)

    # Conv1d(1024, 128, 1): weight (128, 1024, 1) -> stored transposed (1024, 128)
    w_conv = uniform(k_conv, (DIM_IN, DIM_HID), 1.0 / (DIM_IN ** 0.5))
    w_conv = w_conv.astype(jnp.bfloat16).astype(jnp.float32)
    gamma = jnp.ones((1, DIM_HID), jnp.float32)   # BatchNorm1d affine
    beta = jnp.zeros((1, DIM_HID), jnp.float32)
    bnd = 1.0 / (DIM_HID ** 0.5)
    return {
        "w_conv": w_conv,
        "gamma": gamma,
        "beta": beta,
        "w_disc": uniform(k_d, (DIM_HID, DIM_DISC), bnd),
        "b_disc": uniform(k_db, (1, DIM_DISC), bnd),
        "w_mu": uniform(k_m, (DIM_HID, DIM_CONTI), bnd),
        "b_mu": uniform(k_mb, (1, DIM_CONTI), bnd),
        "w_var": uniform(k_v, (DIM_HID, DIM_CONTI), bnd),
        "b_var": uniform(k_vb, (1, DIM_CONTI), bnd),
    }


def _reference(x_ncl, params):
    """Pure-jnp reference mirroring the PyTorch forward (training-mode BN)."""
    x2d = x_ncl.reshape(x_ncl.shape[0], DIM_IN)
    h = x2d @ params["w_conv"]
    mean = jnp.mean(h, axis=0, keepdims=True)
    var = jnp.mean((h - mean) ** 2, axis=0, keepdims=True)
    hb = (h - mean) * lax.rsqrt(var + BN_EPS) * params["gamma"] + params["beta"]
    y = jnp.where(hb >= 0, hb, LRELU_SLOPE * hb)
    disc = y @ params["w_disc"] + params["b_disc"]
    mu = y @ params["w_mu"] + params["b_mu"]
    var_o = jnp.exp(y @ params["w_var"] + params["b_var"])
    return disc, mu, var_o


if __name__ == "__main__":
    key = jax.random.PRNGKey(0)
    k_param, k_x1, k_x2 = jax.random.split(key, 3)
    params = init_params(k_param)
    packed = pack_params(params)     # one-time packing, outside the forward path

    # ---- small batch: fused single-kernel fast path ----
    N1 = 4
    x1 = jax.random.normal(k_x1, (N1, DIM_IN, 1), jnp.float32)
    x1 = x1.astype(jnp.bfloat16).astype(jnp.float32)   # bf16-exact test data
    disc1, mu1, var1 = q_fc_forward(x1, packed)
    jax.block_until_ready((disc1, mu1, var1))

    assert disc1.shape == (N1, DIM_DISC)
    assert mu1.shape == (N1, DIM_CONTI)
    assert var1.shape == (N1, DIM_CONTI)
    assert bool(jnp.all(var1 > 0))

    rd1, rm1, rv1 = _reference(x1, params)
    assert bool(jnp.allclose(disc1, rd1, rtol=2e-3, atol=2e-3))
    assert bool(jnp.allclose(mu1, rm1, rtol=2e-3, atol=2e-3))
    assert bool(jnp.allclose(var1, rv1, rtol=2e-3, atol=2e-3))

    # ---- tiled two-phase path (exercises grid tiling, tail-row masking, bf16 h) ----
    N2 = 50
    x2 = jax.random.normal(k_x2, (N2, DIM_IN, 1), jnp.float32)
    x2 = x2.astype(jnp.bfloat16).astype(jnp.float32)
    disc2, mu2, var2 = _q_fc_forward_two_phase_for_test(x2, packed)
    jax.block_until_ready((disc2, mu2, var2))

    rd2, rm2, rv2 = _reference(x2, params)
    # Looser tolerance: the inter-phase h is intentionally stored in bfloat16.
    assert bool(jnp.allclose(disc2, rd2, rtol=1e-2, atol=1e-2))
    assert bool(jnp.allclose(mu2, rm2, rtol=1e-2, atol=1e-2))
    assert bool(jnp.allclose(var2, rv2, rtol=1e-2, atol=1e-2))
    assert bool(jnp.all(var2 > 0))

    print("KERNEL_OK")
</pallas_src>

<mosaic_0001>
module attributes {stable_mosaic.version = 11 : i64} {
  func.func @_fused_kernel(%arg0: i32, %arg1: memref<4x1024xf32, #tpu.memory_space<vmem>>, %arg2: memref<1024x128xbf16, #tpu.memory_space<vmem>>, %arg3: memref<8x128xf32, #tpu.memory_space<vmem>>, %arg4: memref<128x128xf32, #tpu.memory_space<vmem>>, %arg5: memref<4x128xf32, #tpu.memory_space<vmem>>) attributes {dimension_semantics = [#tpu.dimension_semantics<arbitrary>], iteration_bounds = array<i64: 1>, scalar_prefetch = 0 : i64, scratch_operands = 0 : i64, tpu.core_type = #tpu.core_type<tc>, window_params = [{pipeline_mode = #tpu.pipeline_mode<synchronous>, transform_indices = @transform_0, window_bounds = array<i64: 4, 1024>}, {pipeline_mode = #tpu.pipeline_mode<synchronous>, transform_indices = @transform_1, window_bounds = array<i64: 1024, 128>}, {pipeline_mode = #tpu.pipeline_mode<synchronous>, transform_indices = @transform_2, window_bounds = array<i64: 8, 128>}, {pipeline_mode = #tpu.pipeline_mode<synchronous>, transform_indices = @transform_3, window_bounds = array<i64: 128, 128>}, {pipeline_mode = #tpu.pipeline_mode<synchronous>, transform_indices = @transform_4, window_bounds = array<i64: 4, 128>}]} {
    %c0 = arith.constant 0 : index
    %c0_0 = arith.constant 0 : index
    %0 = vector.load %arg1[%c0, %c0_0] : memref<4x1024xf32, #tpu.memory_space<vmem>>, vector<4x1024xf32>
    %1 = arith.truncf %0 : vector<4x1024xf32> to vector<4x1024xbf16>
    %c0_1 = arith.constant 0 : index
    %c0_2 = arith.constant 0 : index
    %2 = vector.load %arg2[%c0_1, %c0_2] : memref<1024x128xbf16, #tpu.memory_space<vmem>>, vector<1024x128xbf16>
    %cst = arith.constant dense<0.000000e+00> : vector<4x128xf32>
    %3 = tpu.matmul %1, %2, %cst {dimension_numbers = #tpu.dot_dimension_numbers<[1], [0], [0], [1], [0, 0, 1, 1], [], []>} : vector<4x1024xbf16>, vector<1024x128xbf16>, vector<4x128xf32> -> vector<4x128xf32>
    %cst_3 = arith.constant dense<0.000000e+00> : vector<128xf32>
    %4 = vector.multi_reduction <add>, %3, %cst_3 [0] : vector<4x128xf32> to vector<128xf32>
    %5 = vector.shape_cast %4 : vector<128xf32> to vector<1x128xf32>
    %cst_4 = arith.constant 2.500000e-01 : f32
    %6 = vector.broadcast %cst_4 : f32 to vector<1x128xf32>
    %7 = arith.mulf %5, %6 : vector<1x128xf32>
    %8 = arith.mulf %3, %3 : vector<4x128xf32>
    %cst_5 = arith.constant dense<0.000000e+00> : vector<128xf32>
    %9 = vector.multi_reduction <add>, %8, %cst_5 [0] : vector<4x128xf32> to vector<128xf32>
    %10 = vector.shape_cast %9 : vector<128xf32> to vector<1x128xf32>
    %cst_6 = arith.constant 2.500000e-01 : f32
    %11 = vector.broadcast %cst_6 : f32 to vector<1x128xf32>
    %12 = arith.mulf %10, %11 : vector<1x128xf32>
    %13 = arith.mulf %7, %7 : vector<1x128xf32>
    %14 = arith.subf %12, %13 : vector<1x128xf32>
    %cst_7 = arith.constant 0.000000e+00 : f32
    %15 = vector.broadcast %cst_7 : f32 to vector<1x128xf32>
    %16 = arith.maximumf %14, %15 : vector<1x128xf32>
    %c0_8 = arith.constant 0 : index
    %c0_9 = arith.constant 0 : index
    %17 = vector.load %arg3[%c0_8, %c0_9] : memref<8x128xf32, #tpu.memory_space<vmem>>, vector<1x128xf32>
    %c1 = arith.constant 1 : index
    %c0_10 = arith.constant 0 : index
    %18 = vector.load %arg3[%c1, %c0_10] : memref<8x128xf32, #tpu.memory_space<vmem>>, vector<1x128xf32>
    %c2 = arith.constant 2 : index
    %c0_11 = arith.constant 0 : index
    %19 = vector.load %arg3[%c2, %c0_11] : memref<8x128xf32, #tpu.memory_space<vmem>>, vector<1x128xf32>
    %c0_12 = arith.constant 0 : index
    %c0_13 = arith.constant 0 : index
    %20 = vector.load %arg4[%c0_12, %c0_13] : memref<128x128xf32, #tpu.memory_space<vmem>>, vector<128x128xf32>
    %cst_14 = arith.constant 9.99999974E-6 : f32
    %21 = vector.broadcast %cst_14 : f32 to vector<1x128xf32>
    %22 = arith.addf %16, %21 : vector<1x128xf32>
    %23 = math.rsqrt %22 : vector<1x128xf32>
    %24 = arith.mulf %17, %23 : vector<1x128xf32>
    %25 = arith.mulf %7, %24 : vector<1x128xf32>
    %26 = arith.subf %18, %25 : vector<1x128xf32>
    %27 = vector.broadcast %24 : vector<1x128xf32> to vector<4x128xf32>
    %28 = arith.mulf %3, %27 : vector<4x128xf32>
    %29 = vector.broadcast %26 : vector<1x128xf32> to vector<4x128xf32>
    %30 = arith.addf %28, %29 : vector<4x128xf32>
    %cst_15 = arith.constant 0.000000e+00 : f32
    %31 = vector.broadcast %cst_15 : f32 to vector<4x128xf32>
    %32 = arith.cmpf oge, %30, %31 : vector<4x128xf32>
    %cst_16 = arith.constant 1.000000e-01 : f32
    %33 = vector.broadcast %cst_16 : f32 to vector<4x128xf32>
    %34 = arith.mulf %33, %30 : vector<4x128xf32>
    %35 = arith.select %32, %30, %34 : vector<4x128xi1>, vector<4x128xf32>
    %cst_17 = arith.constant dense<0.000000e+00> : vector<4x128xf32>
    %36 = tpu.matmul %35, %20, %cst_17 {dimension_numbers = #tpu.dot_dimension_numbers<[1], [0], [0], [1], [0, 0, 1, 1], [], []>} : vector<4x128xf32>, vector<128x128xf32>, vector<4x128xf32> -> vector<4x128xf32>
    %37 = vector.broadcast %19 : vector<1x128xf32> to vector<4x128xf32>
    %38 = arith.addf %36, %37 : vector<4x128xf32>
    %39 = tpu.iota {dimensions = array<i32: 1>} : vector<4x128xi32>
    %c5_i32 = arith.constant 5 : i32
    %40 = vector.broadcast %c5_i32 : i32 to vector<4x128xi32>
    %41 = arith.cmpi sge, %39, %40 : vector<4x128xi32>
    %c7_i32 = arith.constant 7 : i32
    %42 = vector.broadcast %c7_i32 : i32 to vector<4x128xi32>
    %43 = arith.cmpi slt, %39, %42 : vector<4x128xi32>
    %44 = arith.andi %41, %43 : vector<4x128xi1>
    %45 = math.exp %38 : vector<4x128xf32>
    %46 = arith.select %44, %45, %38 : vector<4x128xi1>, vector<4x128xf32>
    %c0_18 = arith.constant 0 : index
    %c0_19 = arith.constant 0 : index
    %47 = vector.load %arg5[%c0_18, %c0_19] : memref<4x128xf32, #tpu.memory_space<vmem>>, vector<4x128xf32>
    tpu.vector_store %arg5[%c0_18, %c0_19], %46 {strides = array<i32>} : memref<4x128xf32, #tpu.memory_space<vmem>>, vector<4x128xf32>,
    return
  }
  func.func @transform_0(%arg0: i32) -> (i32, i32) {
    %c0_i32 = arith.constant 0 : i32
    %c0_i32_0 = arith.constant 0 : i32
    %c0_i32_1 = arith.constant 0 : i32
    return %c0_i32, %c0_i32_0 : i32, i32
  }
  func.func @transform_1(%arg0: i32) -> (i32, i32) {
    %c0_i32 = arith.constant 0 : i32
    %c0_i32_0 = arith.constant 0 : i32
    %c0_i32_1 = arith.constant 0 : i32
    return %c0_i32, %c0_i32_0 : i32, i32
  }
  func.func @transform_2(%arg0: i32) -> (i32, i32) {
    %c0_i32 = arith.constant 0 : i32
    %c0_i32_0 = arith.constant 0 : i32
    %c0_i32_1 = arith.constant 0 : i32
    return %c0_i32, %c0_i32_0 : i32, i32
  }
  func.func @transform_3(%arg0: i32) -> (i32, i32) {
    %c0_i32 = arith.constant 0 : i32
    %c0_i32_0 = arith.constant 0 : i32
    %c0_i32_1 = arith.constant 0 : i32
    return %c0_i32, %c0_i32_0 : i32, i32
  }
  func.func @transform_4(%arg0: i32) -> (i32, i32) {
    %c0_i32 = arith.constant 0 : i32
    %c0_i32_0 = arith.constant 0 : i32
    %c0_i32_1 = arith.constant 0 : i32
    return %c0_i32, %c0_i32_0 : i32, i32
  }
}

</mosaic_0001>

<llo_original>
// kernel: q_fc_forward.1
$region0: #{q_fc_forward.1}
  #allocation0 [shape = 'u32[]', space=smem, size = 0x4, offset = 0x4, fixed_abs, tag = 'smem constant byte address 0x4 - core index']
  #allocation1 [shape = 'u32[144,128]{1,0:T(1,128)}', space=vmem, size = 0x12000, scoped, tag = 'internal scratch']
  %s0 = inlined_call_operand.vmem [shape: f32[4,1024], index: 0, kind: input, shape index: {}]
  %s1 = inlined_call_operand.hbm [shape: bf16[1024,128], index: 1, kind: input, shape index: {}]
  %s2 = inlined_call_operand.vmem [shape: f32[8,128], index: 2, kind: input, shape index: {}]
  %s3 = inlined_call_operand.hbm [shape: f32[128,128], index: 3, kind: input, shape index: {}]
  %s4 = inlined_call_operand.vmem [shape: f32[4,128], index: 4, kind: output, shape index: {}]
  %s5 = sld [smem:[#allocation0]]
  $region34: #{q_fc_forward.1} parent=0
    _
  %s7 = ssub.s32 1, %s5
  %s8 = scalar_select 0, %s7, %s5
  $region1: #{q_fc_forward.1} parent=0
    #allocation2 [shape = 'u8[262144]{0}', space=vmem, size = 0x40000, scoped, tag = 'input window, operand 1, single buffered']
    #allocation3 [shape = 's32[1]{0}', space=sflag, size = 0x4, scoped, tag = 'scoped memory for q_fc_forward.1']
    #allocation4 [shape = 'u8[65536]{0}', space=vmem, size = 0x10000, scoped, tag = 'input window, operand 3, single buffered']
    #allocation5 [shape = 's32[1]{0}', space=sflag, size = 0x4, scoped, tag = 'scoped memory for q_fc_forward.1']
    %9 = vsyncpa [#allocation3], 0
    %10 = vsyncpa [#allocation5], 0
    // Predicated region
    $region2: #{q_fc_forward.1} parent=1 // pred_check
      _
    $region3: #{q_fc_forward.1} parent=1 // pred_check_branch
      %12 = sbr.rel (0) target = $region5
    $region4: #{q_fc_forward.1} parent=1 // pred_region
      _
    $region5: #{q_fc_forward.1} parent=1 // pred_fallthru
      _
    // Predicated region
    $region6: #{q_fc_forward.1} parent=1 // pred_check
      _
    $region7: #{q_fc_forward.1} parent=1 // pred_check_branch
      %14 = sbr.rel (0) target = $region9
    $region8: #{q_fc_forward.1} parent=1 // pred_region
      %s16 = ssub.s32 8192, 8192
      %17 = vsyncadd [#allocation3], %s16
      %s18 = sshll.u32 [#allocation2], 4
      %s19 = int_to_ptr.vmem [resolvable:$true] %s18
      %24 = dma.hbm_to_vmem [thread:$0]  %s1, 8192, %s19, [#allocation3], 64, 64, 4
    $region9: #{q_fc_forward.1} parent=1 // pred_fallthru
      _
    // Predicated region
    $region10: #{q_fc_forward.1} parent=1 // pred_check
      _
    $region11: #{q_fc_forward.1} parent=1 // pred_check_branch
      %26 = sbr.rel (0) target = $region13
    $region12: #{q_fc_forward.1} parent=1 // pred_region
      _
    $region13: #{q_fc_forward.1} parent=1 // pred_fallthru
      _
    // Predicated region
    $region14: #{q_fc_forward.1} parent=1 // pred_check
      _
    $region15: #{q_fc_forward.1} parent=1 // pred_check_branch
      %28 = sbr.rel (0) target = $region17
    $region16: #{q_fc_forward.1} parent=1 // pred_region
      %s30 = ssub.s32 2048, 2048
      %31 = vsyncadd [#allocation5], %s30
      %s32 = sshll.u32 [#allocation4], 4
      %s33 = int_to_ptr.vmem [resolvable:$true] %s32
      %38 = dma.hbm_to_vmem [thread:$0]  %s3, 2048, %s33, [#allocation5], 128, 128, 8
    $region17: #{q_fc_forward.1} parent=1 // pred_fallthru
      _
    // Predicated region
    $region18: #{q_fc_forward.1} parent=1 // pred_check
      _
    $region19: #{q_fc_forward.1} parent=1 // pred_check_branch
      %40 = sbr.rel (0) target = $region21
    $region20: #{q_fc_forward.1} parent=1 // pred_region
      %41 = dma.done [#allocation3], 8192
    $region21: #{q_fc_forward.1} parent=1 // pred_fallthru
      _
    // Predicated region
    $region22: #{q_fc_forward.1} parent=1 // pred_check
      _
    $region23: #{q_fc_forward.1} parent=1 // pred_check_branch
      %43 = sbr.rel (0) target = $region25
    $region24: #{q_fc_forward.1} parent=1 // pred_region
      %44 = dma.done [#allocation5], 2048
    $region25: #{q_fc_forward.1} parent=1 // pred_fallthru
      _
    %v46 = vld [vmem:[%s0] sm:$0xff]
    %v47 = vld [vmem:[%s0 + $0x8] sm:$0xff]
    %v48 = vld [vmem:[%s0 + $0x10] sm:$0xff]
    %v49 = vld [vmem:[%s0 + $0x18] sm:$0xff]
    %v54 = vcombine.high %v46, %v46
    %v55 = vcombine.high %v47, %v47
    %v56 = vcombine.high %v48, %v48
    %v57 = vcombine.high %v49, %v49
    %v62 = vpack.c.bf16 %v46, %v46
    %v63 = vpack.c.bf16 %v54, %v54
    %v64 = vpack.c.bf16 %v47, %v47
    %v65 = vpack.c.bf16 %v55, %v55
    %v66 = vpack.c.bf16 %v48, %v48
    %v67 = vpack.c.bf16 %v56, %v56
    %v68 = vpack.c.bf16 %v49, %v49
    %v69 = vpack.c.bf16 %v57, %v57
    %v70 = vld [vmem:[#allocation2] sm:$0xf]
    %v71 = vld [vmem:[#allocation2 + $0x4] sm:$0xf]
    %v72 = vld [vmem:[#allocation2 + $0x8] sm:$0xf]
    %v73 = vld [vmem:[#allocation2 + $0xc] sm:$0xf]
    %v74 = vld [vmem:[#allocation2 + $0x10] sm:$0xf]
    %v75 = vld [vmem:[#allocation2 + $0x14] sm:$0xf]
    %v76 = vld [vmem:[#allocation2 + $0x18] sm:$0xf]
    %v77 = vld [vmem:[#allocation2 + $0x1c] sm:$0xf]
    %v78 = vld [vmem:[#allocation2 + $0x20] sm:$0xf]
    %v79 = vld [vmem:[#allocation2 + $0x24] sm:$0xf]
    %v80 = vld [vmem:[#allocation2 + $0x28] sm:$0xf]
    %v81 = vld [vmem:[#allocation2 + $0x2c] sm:$0xf]
    %v82 = vld [vmem:[#allocation2 + $0x30] sm:$0xf]
    %v83 = vld [vmem:[#allocation2 + $0x34] sm:$0xf]
    %v84 = vld [vmem:[#allocation2 + $0x38] sm:$0xf]
    %v85 = vld [vmem:[#allocation2 + $0x3c] sm:$0xf]
    %v86 = vld [vmem:[#allocation2 + $0x40] sm:$0xf]
    %v87 = vld [vmem:[#allocation2 + $0x44] sm:$0xf]
    %v88 = vld [vmem:[#allocation2 + $0x48] sm:$0xf]
    %v89 = vld [vmem:[#allocation2 + $0x4c] sm:$0xf]
    %v90 = vld [vmem:[#allocation2 + $0x50] sm:$0xf]
    %v91 = vld [vmem:[#allocation2 + $0x54] sm:$0xf]
    %v92 = vld [vmem:[#allocation2 + $0x58] sm:$0xf]
    %v93 = vld [vmem:[#allocation2 + $0x5c] sm:$0xf]
    %v94 = vld [vmem:[#allocation2 + $0x60] sm:$0xf]
    %v95 = vld [vmem:[#allocation2 + $0x64] sm:$0xf]
    %v96 = vld [vmem:[#allocation2 + $0x68] sm:$0xf]
    %v97 = vld [vmem:[#allocation2 + $0x6c] sm:$0xf]
    %v98 = vld [vmem:[#allocation2 + $0x70] sm:$0xf]
    %v99 = vld [vmem:[#allocation2 + $0x74] sm:$0xf]
    %v100 = vld [vmem:[#allocation2 + $0x78] sm:$0xf]
    %v101 = vld [vmem:[#allocation2 + $0x7c] sm:$0xf]
    %v102 = vld [vmem:[#allocation2 + $0x80] sm:$0xf]
    %v103 = vld [vmem:[#allocation2 + $0x84] sm:$0xf]
    %v104 = vld [vmem:[#allocation2 + $0x88] sm:$0xf]
    %v105 = vld [vmem:[#allocation2 + $0x8c] sm:$0xf]
    %v106 = vld [vmem:[#allocation2 + $0x90] sm:$0xf]
    %v107 = vld [vmem:[#allocation2 + $0x94] sm:$0xf]
    %v108 = vld [vmem:[#allocation2 + $0x98] sm:$0xf]
    %v109 = vld [vmem:[#allocation2 + $0x9c] sm:$0xf]
    %v110 = vld [vmem:[#allocation2 + $0xa0] sm:$0xf]
    %v111 = vld [vmem:[#allocation2 + $0xa4] sm:$0xf]
    %v112 = vld [vmem:[#allocation2 + $0xa8] sm:$0xf]
    %v113 = vld [vmem:[#allocation2 + $0xac] sm:$0xf]
    %v114 = vld [vmem:[#allocation2 + $0xb0] sm:$0xf]
    %v115 = vld [vmem:[#allocation2 + $0xb4] sm:$0xf]
    %v116 = vld [vmem:[#allocation2 + $0xb8] sm:$0xf]
    %v117 = vld [vmem:[#allocation2 + $0xbc] sm:$0xf]
    %v118 = vld [vmem:[#allocation2 + $0xc0] sm:$0xf]
    %v119 = vld [vmem:[#allocation2 + $0xc4] sm:$0xf]
    %v120 = vld [vmem:[#allocation2 + $0xc8] sm:$0xf]
    %v121 = vld [vmem:[#allocation2 + $0xcc] sm:$0xf]
    %v122 = vld [vmem:[#allocation2 + $0xd0] sm:$0xf]
    %v123 = vld [vmem:[#allocation2 + $0xd4] sm:$0xf]
    %v124 = vld [vmem:[#allocation2 + $0xd8] sm:$0xf]
    %v125 = vld [vmem:[#allocation2 + $0xdc] sm:$0xf]
    %v126 = vld [vmem:[#allocation2 + $0xe0] sm:$0xf]
    %v127 = vld [vmem:[#allocation2 + $0xe4] sm:$0xf]
    %v128 = vld [vmem:[#allocation2 + $0xe8] sm:$0xf]
    %v129 = vld [vmem:[#allocation2 + $0xec] sm:$0xf]
    %v130 = vld [vmem:[#allocation2 + $0xf0] sm:$0xf]
    %v131 = vld [vmem:[#allocation2 + $0xf4] sm:$0xf]
    %v132 = vld [vmem:[#allocation2 + $0xf8] sm:$0xf]
    %v133 = vld [vmem:[#allocation2 + $0xfc] sm:$0xf]
    %v134 = vld [vmem:[#allocation2 + $0x100] sm:$0xf]
    %v135 = vld [vmem:[#allocation2 + $0x104] sm:$0xf]
    %v136 = vld [vmem:[#allocation2 + $0x108] sm:$0xf]
    %v137 = vld [vmem:[#allocation2 + $0x10c] sm:$0xf]
    %v138 = vld [vmem:[#allocation2 + $0x110] sm:$0xf]
    %v139 = vld [vmem:[#allocation2 + $0x114] sm:$0xf]
    %v140 = vld [vmem:[#allocation2 + $0x118] sm:$0xf]
    %v141 = vld [vmem:[#allocation2 + $0x11c] sm:$0xf]
    %v142 = vld [vmem:[#allocation2 + $0x120] sm:$0xf]
    %v143 = vld [vmem:[#allocation2 + $0x124] sm:$0xf]
    %v144 = vld [vmem:[#allocation2 + $0x128] sm:$0xf]
    %v145 = vld [vmem:[#allocation2 + $0x12c] sm:$0xf]
    %v146 = vld [vmem:[#allocation2 + $0x130] sm:$0xf]
    %v147 = vld [vmem:[#allocation2 + $0x134] sm:$0xf]
    %v148 = vld [vmem:[#allocation2 + $0x138] sm:$0xf]
    %v149 = vld [vmem:[#allocation2 + $0x13c] sm:$0xf]
    %v150 = vld [vmem:[#allocation2 + $0x140] sm:$0xf]
    %v151 = vld [vmem:[#allocation2 + $0x144] sm:$0xf]
    %v152 = vld [vmem:[#allocation2 + $0x148] sm:$0xf]
    %v153 = vld [vmem:[#allocation2 + $0x14c] sm:$0xf]
    %v154 = vld [vmem:[#allocation2 + $0x150] sm:$0xf]
    %v155 = vld [vmem:[#allocation2 + $0x154] sm:$0xf]
    %v156 = vld [vmem:[#allocation2 + $0x158] sm:$0xf]
    %v157 = vld [vmem:[#allocation2 + $0x15c] sm:$0xf]
    %v158 = vld [vmem:[#allocation2 + $0x160] sm:$0xf]
    %v159 = vld [vmem:[#allocation2 + $0x164] sm:$0xf]
    %v160 = vld [vmem:[#allocation2 + $0x168] sm:$0xf]
    %v161 = vld [vmem:[#allocation2 + $0x16c] sm:$0xf]
    %v162 = vld [vmem:[#allocation2 + $0x170] sm:$0xf]
    %v163 = vld [vmem:[#allocation2 + $0x174] sm:$0xf]
    %v164 = vld [vmem:[#allocation2 + $0x178] sm:$0xf]
    %v165 = vld [vmem:[#allocation2 + $0x17c] sm:$0xf]
    %v166 = vld [vmem:[#allocation2 + $0x180] sm:$0xf]
    %v167 = vld [vmem:[#allocation2 + $0x184] sm:$0xf]
    %v168 = vld [vmem:[#allocation2 + $0x188] sm:$0xf]
    %v169 = vld [vmem:[#allocation2 + $0x18c] sm:$0xf]
    %v170 = vld [vmem:[#allocation2 + $0x190] sm:$0xf]
    %v171 = vld [vmem:[#allocation2 + $0x194] sm:$0xf]
    %v172 = vld [vmem:[#allocation2 + $0x198] sm:$0xf]
    %v173 = vld [vmem:[#allocation2 + $0x19c] sm:$0xf]
    %v174 = vld [vmem:[#allocation2 + $0x1a0] sm:$0xf]
    %v175 = vld [vmem:[#allocation2 + $0x1a4] sm:$0xf]
    %v176 = vld [vmem:[#allocation2 + $0x1a8] sm:$0xf]
    %v177 = vld [vmem:[#allocation2 + $0x1ac] sm:$0xf]
    %v178 = vld [vmem:[#allocation2 + $0x1b0] sm:$0xf]
    %v179 = vld [vmem:[#allocation2 + $0x1b4] sm:$0xf]
    %v180 = vld [vmem:[#allocation2 + $0x1b8] sm:$0xf]
    %v181 = vld [vmem:[#allocation2 + $0x1bc] sm:$0xf]
    %v182 = vld [vmem:[#allocation2 + $0x1c0] sm:$0xf]
    %v183 = vld [vmem:[#allocation2 + $0x1c4] sm:$0xf]
    %v184 = vld [vmem:[#allocation2 + $0x1c8] sm:$0xf]
    %v185 = vld [vmem:[#allocation2 + $0x1cc] sm:$0xf]
    %v186 = vld [vmem:[#allocation2 + $0x1d0] sm:$0xf]
    %v187 = vld [vmem:[#allocation2 + $0x1d4] sm:$0xf]
    %v188 = vld [vmem:[#allocation2 + $0x1d8] sm:$0xf]
    %v189 = vld [vmem:[#allocation2 + $0x1dc] sm:$0xf]
    %v190 = vld [vmem:[#allocation2 + $0x1e0] sm:$0xf]
    %v191 = vld [vmem:[#allocation2 + $0x1e4] sm:$0xf]
    %v192 = vld [vmem:[#allocation2 + $0x1e8] sm:$0xf]
    %v193 = vld [vmem:[#allocation2 + $0x1ec] sm:$0xf]
    %v194 = vld [vmem:[#allocation2 + $0x1f0] sm:$0xf]
    %v195 = vld [vmem:[#allocation2 + $0x1f4] sm:$0xf]
    %v196 = vld [vmem:[#allocation2 + $0x1f8] sm:$0xf]
    %v197 = vld [vmem:[#allocation2 + $0x1fc] sm:$0xf]
    %v326 = vunpack.c.l.b16 %v70
    %v327 = vunpack.c.l.b16 %v71
    %v328 = vunpack.c.l.b16 %v72
    %v329 = vunpack.c.l.b16 %v73
    %v330 = vunpack.c.l.b16 %v74
    %v331 = vunpack.c.l.b16 %v75
    %v332 = vunpack.c.l.b16 %v76
    %v333 = vunpack.c.l.b16 %v77
    %v334 = vunpack.c.l.b16 %v78
    %v335 = vunpack.c.l.b16 %v79
    %v336 = vunpack.c.l.b16 %v80
    %v337 = vunpack.c.l.b16 %v81
    %v338 = vunpack.c.l.b16 %v82
    %v339 = vunpack.c.l.b16 %v83
    %v340 = vunpack.c.l.b16 %v84
    %v341 = vunpack.c.l.b16 %v85
    %v342 = vunpack.c.l.b16 %v86
    %v343 = vunpack.c.l.b16 %v87
    %v344 = vunpack.c.l.b16 %v88
    %v345 = vunpack.c.l.b16 %v89
    %v346 = vunpack.c.l.b16 %v90
    %v347 = vunpack.c.l.b16 %v91
    %v348 = vunpack.c.l.b16 %v92
    %v349 = vunpack.c.l.b16 %v93
    %v350 = vunpack.c.l.b16 %v94
    %v351 = vunpack.c.l.b16 %v95
    %v352 = vunpack.c.l.b16 %v96
    %v353 = vunpack.c.l.b16 %v97
    %v354 = vunpack.c.l.b16 %v98
    %v355 = vunpack.c.l.b16 %v99
    %v356 = vunpack.c.l.b16 %v100
    %v357 = vunpack.c.l.b16 %v101
    %v358 = vunpack.c.l.b16 %v102
    %v359 = vunpack.c.l.b16 %v103
    %v360 = vunpack.c.l.b16 %v104
    %v361 = vunpack.c.l.b16 %v105
    %v362 = vunpack.c.l.b16 %v106
    %v363 = vunpack.c.l.b16 %v107
    %v364 = vunpack.c.l.b16 %v108
    %v365 = vunpack.c.l.b16 %v109
    %v366 = vunpack.c.l.b16 %v110
    %v367 = vunpack.c.l.b16 %v111
    %v368 = vunpack.c.l.b16 %v112
    %v369 = vunpack.c.l.b16 %v113
    %v370 = vunpack.c.l.b16 %v114
    %v371 = vunpack.c.l.b16 %v115
    %v372 = vunpack.c.l.b16 %v116
    %v373 = vunpack.c.l.b16 %v117
    %v374 = vunpack.c.l.b16 %v118
    %v375 = vunpack.c.l.b16 %v119
    %v376 = vunpack.c.l.b16 %v120
    %v377 = vunpack.c.l.b16 %v121
    %v378 = vunpack.c.l.b16 %v122
    %v379 = vunpack.c.l.b16 %v123
    %v380 = vunpack.c.l.b16 %v124
    %v381 = vunpack.c.l.b16 %v125
    %v382 = vunpack.c.l.b16 %v126
    %v383 = vunpack.c.l.b16 %v127
    %v384 = vunpack.c.l.b16 %v128
    %v385 = vunpack.c.l.b16 %v129
    %v386 = vunpack.c.l.b16 %v130
    %v387 = vunpack.c.l.b16 %v131
    %v388 = vunpack.c.l.b16 %v132
    %v389 = vunpack.c.l.b16 %v133
    %v390 = vunpack.c.l.b16 %v134
    %v391 = vunpack.c.l.b16 %v135
    %v392 = vunpack.c.l.b16 %v136
    %v393 = vunpack.c.l.b16 %v137
    %v394 = vunpack.c.l.b16 %v138
    %v395 = vunpack.c.l.b16 %v139
    %v396 = vunpack.c.l.b16 %v140
    %v397 = vunpack.c.l.b16 %v141
    %v398 = vunpack.c.l.b16 %v142
    %v399 = vunpack.c.l.b16 %v143
    %v400 = vunpack.c.l.b16 %v144
    %v401 = vunpack.c.l.b16 %v145
    %v402 = vunpack.c.l.b16 %v146
    %v403 = vunpack.c.l.b16 %v147
    %v404 = vunpack.c.l.b16 %v148
    %v405 = vunpack.c.l.b16 %v149
    %v406 = vunpack.c.l.b16 %v150
    %v407 = vunpack.c.l.b16 %v151
    %v408 = vunpack.c.l.b16 %v152
    %v409 = vunpack.c.l.b16 %v153
    %v410 = vunpack.c.l.b16 %v154
    %v411 = vunpack.c.l.b16 %v155
    %v412 = vunpack.c.l.b16 %v156
    %v413 = vunpack.c.l.b16 %v157
    %v414 = vunpack.c.l.b16 %v158
    %v415 = vunpack.c.l.b16 %v159
    %v416 = vunpack.c.l.b16 %v160
    %v417 = vunpack.c.l.b16 %v161
    %v418 = vunpack.c.l.b16 %v162
    %v419 = vunpack.c.l.b16 %v163
    %v420 = vunpack.c.l.b16 %v164
    %v421 = vunpack.c.l.b16 %v165
    %v422 = vunpack.c.l.b16 %v166
    %v423 = vunpack.c.l.b16 %v167
    %v424 = vunpack.c.l.b16 %v168
    %v425 = vunpack.c.l.b16 %v169
    %v426 = vunpack.c.l.b16 %v170
    %v427 = vunpack.c.l.b16 %v171
    %v428 = vunpack.c.l.b16 %v172
    %v429 = vunpack.c.l.b16 %v173
    %v430 = vunpack.c.l.b16 %v174
    %v431 = vunpack.c.l.b16 %v175
    %v432 = vunpack.c.l.b16 %v176
    %v433 = vunpack.c.l.b16 %v177
    %v434 = vunpack.c.l.b16 %v178
    %v435 = vunpack.c.l.b16 %v179
    %v436 = vunpack.c.l.b16 %v180
    %v437 = vunpack.c.l.b16 %v181
    %v438 = vunpack.c.l.b16 %v182
    %v439 = vunpack.c.l.b16 %v183
    %v440 = vunpack.c.l.b16 %v184
    %v441 = vunpack.c.l.b16 %v185
    %v442 = vunpack.c.l.b16 %v186
    %v443 = vunpack.c.l.b16 %v187
    %v444 = vunpack.c.l.b16 %v188
    %v445 = vunpack.c.l.b16 %v189
    %v446 = vunpack.c.l.b16 %v190
    %v447 = vunpack.c.l.b16 %v191
    %v448 = vunpack.c.l.b16 %v192
    %v449 = vunpack.c.l.b16 %v193
    %v450 = vunpack.c.l.b16 %v194
    %v451 = vunpack.c.l.b16 %v195
    %v452 = vunpack.c.l.b16 %v196
    %v453 = vunpack.c.l.b16 %v197
    %v454 = vpack.c.b16 %v327, %v326
    %v455 = vpack.c.b16 %v329, %v328
    %v456 = vpack.c.b16 %v331, %v330
    %v457 = vpack.c.b16 %v333, %v332
    %v458 = vpack.c.b16 %v335, %v334
    %v459 = vpack.c.b16 %v337, %v336
    %v460 = vpack.c.b16 %v339, %v338
    %v461 = vpack.c.b16 %v341, %v340
    %v462 = vpack.c.b16 %v343, %v342
    %v463 = vpack.c.b16 %v345, %v344
    %v464 = vpack.c.b16 %v347, %v346
    %v465 = vpack.c.b16 %v349, %v348
    %v466 = vpack.c.b16 %v351, %v350
    %v467 = vpack.c.b16 %v353, %v352
    %v468 = vpack.c.b16 %v355, %v354
    %v469 = vpack.c.b16 %v357, %v356
    %v470 = vpack.c.b16 %v359, %v358
    %v471 = vpack.c.b16 %v361, %v360
    %v472 = vpack.c.b16 %v363, %v362
    %v473 = vpack.c.b16 %v365, %v364
    %v474 = vpack.c.b16 %v367, %v366
    %v475 = vpack.c.b16 %v369, %v368
    %v476 = vpack.c.b16 %v371, %v370
    %v477 = vpack.c.b16 %v373, %v372
    %v478 = vpack.c.b16 %v375, %v374
    %v479 = vpack.c.b16 %v377, %v376
    %v480 = vpack.c.b16 %v379, %v378
    %v481 = vpack.c.b16 %v381, %v380
    %v482 = vpack.c.b16 %v383, %v382
    %v483 = vpack.c.b16 %v385, %v384
    %v484 = vpack.c.b16 %v387, %v386
    %v485 = vpack.c.b16 %v389, %v388
    %v486 = vpack.c.b16 %v391, %v390
    %v487 = vpack.c.b16 %v393, %v392
    %v488 = vpack.c.b16 %v395, %v394
    %v489 = vpack.c.b16 %v397, %v396
    %v490 = vpack.c.b16 %v399, %v398
    %v491 = vpack.c.b16 %v401, %v400
    %v492 = vpack.c.b16 %v403, %v402
    %v493 = vpack.c.b16 %v405, %v404
    %v494 = vpack.c.b16 %v407, %v406
    %v495 = vpack.c.b16 %v409, %v408
    %v496 = vpack.c.b16 %v411, %v410
    %v497 = vpack.c.b16 %v413, %v412
    %v498 = vpack.c.b16 %v415, %v414
    %v499 = vpack.c.b16 %v417, %v416
    %v500 = vpack.c.b16 %v419, %v418
    %v501 = vpack.c.b16 %v421, %v420
    %v502 = vpack.c.b16 %v423, %v422
    %v503 = vpack.c.b16 %v425, %v424
    %v504 = vpack.c.b16 %v427, %v426
    %v505 = vpack.c.b16 %v429, %v428
    %v506 = vpack.c.b16 %v431, %v430
    %v507 = vpack.c.b16 %v433, %v432
    %v508 = vpack.c.b16 %v435, %v434
    %v509 = vpack.c.b16 %v437, %v436
    %v510 = vpack.c.b16 %v439, %v438
    %v511 = vpack.c.b16 %v441, %v440
    %v512 = vpack.c.b16 %v443, %v442
    %v513 = vpack.c.b16 %v445, %v444
    %v514 = vpack.c.b16 %v447, %v446
    %v515 = vpack.c.b16 %v449, %v448
    %v516 = vpack.c.b16 %v451, %v450
    %v517 = vpack.c.b16 %v453, %v452
    %582 = vmatprep.subr.bf16.mxu0 0
    %583 = vmatpush1.bf16.msra.mxu0 %v461
    %584 = vmatprep.subr.bf16.mxu0 0
    %585 = vmatpush1.bf16.msra.mxu0 %v460
    %586 = vmatprep.subr.bf16.mxu0 0
    %587 = vmatpush1.bf16.msra.mxu0 %v459
    %588 = vmatprep.subr.bf16.mxu0 0
    %589 = vmatpush1.bf16.msra.mxu0 %v458
    %590 = vmatprep.subr.bf16.mxu0 0
    %591 = vmatpush1.bf16.msra.mxu0 %v457
    %592 = vmatprep.subr.bf16.mxu0 0
    %593 = vmatpush1.bf16.msra.mxu0 %v456
    %594 = vmatprep.subr.bf16.mxu0 0
    %595 = vmatpush1.bf16.msra.mxu0 %v455
    %596 = vmatprep.subr.bf16.mxu0 0
    %597 = vmatpush1.bf16.msra.mxu0 %v454
    %598 = vmatprep.subr.bf16.mxu0 0
    %599 = vmatpush2.bf16.msra.mxu0 %v469
    %600 = vmatprep.subr.bf16.mxu0 0
    %601 = vmatpush2.bf16.msra.mxu0 %v468
    %602 = vmatprep.subr.bf16.mxu0 0
    %603 = vmatpush2.bf16.msra.mxu0 %v467
    %604 = vmatprep.subr.bf16.mxu0 0
    %605 = vmatpush2.bf16.msra.mxu0 %v466
    %606 = vmatprep.subr.bf16.mxu0 0
    %607 = vmatpush2.bf16.msra.mxu0 %v465
    %608 = vmatprep.subr.bf16.mxu0 0
    %609 = vmatpush2.bf16.msra.mxu0 %v464
    %610 = vmatprep.subr.bf16.mxu0 0
    %611 = vmatpush2.bf16.msra.mxu0 %v463
    %612 = vmatprep.subr.bf16.mxu0 0
    %613 = vmatpush2.bf16.msra.mxu0 %v462
    %614 = vmatprep.mubr.bf16.mxu0 %v63
    %615 = vmatmul.mubr.bf16.gmra.mxu0 %v62
    %v616 = vpop.f32.mrf.mxu0
    %v617 = vadd.f32 0.0, %v616
    %v618 = vpop.f32.mrf.mxu0
    %v619 = vpop.f32.mrf.mxu0
    %v620 = vpop.f32.mrf.mxu0
    %621 = vdwg.mxu0
    %622 = vmatprep.subr.bf16.mxu0 0
    %623 = vmatpush1.bf16.msra.mxu0 %v477
    %624 = vmatprep.subr.bf16.mxu0 0
    %625 = vmatpush1.bf16.msra.mxu0 %v476
    %626 = vmatprep.subr.bf16.mxu0 0
    %627 = vmatpush1.bf16.msra.mxu0 %v475
    %628 = vmatprep.subr.bf16.mxu0 0
    %629 = vmatpush1.bf16.msra.mxu0 %v474
    %630 = vmatprep.subr.bf16.mxu0 0
    %631 = vmatpush1.bf16.msra.mxu0 %v473
    %632 = vmatprep.subr.bf16.mxu0 0
    %633 = vmatpush1.bf16.msra.mxu0 %v472
    %634 = vmatprep.subr.bf16.mxu0 0
    %635 = vmatpush1.bf16.msra.mxu0 %v471
    %636 = vmatprep.subr.bf16.mxu0 0
    %637 = vmatpush1.bf16.msra.mxu0 %v470
    %638 = vmatprep.subr.bf16.mxu0 0
    %639 = vmatpush2.bf16.msra.mxu0 %v485
    %640 = vmatprep.subr.bf16.mxu0 0
    %641 = vmatpush2.bf16.msra.mxu0 %v484
    %642 = vmatprep.subr.bf16.mxu0 0
    %643 = vmatpush2.bf16.msra.mxu0 %v483
    %644 = vmatprep.subr.bf16.mxu0 0
    %645 = vmatpush2.bf16.msra.mxu0 %v482
    %646 = vmatprep.subr.bf16.mxu0 0
    %647 = vmatpush2.bf16.msra.mxu0 %v481
    %648 = vmatprep.subr.bf16.mxu0 0
    %649 = vmatpush2.bf16.msra.mxu0 %v480
    %650 = vmatprep.subr.bf16.mxu0 0
    %651 = vmatpush2.bf16.msra.mxu0 %v479
    %652 = vmatprep.subr.bf16.mxu0 0
    %653 = vmatpush2.bf16.msra.mxu0 %v478
    %654 = vmatprep.mubr.bf16.mxu0 %v65
    %655 = vmatmul.mubr.bf16.gmra.mxu0 %v64
    %v656 = vpop.f32.mrf.mxu0
    %v657 = vadd.f32 %v617, %v656
    %v658 = vpop.f32.mrf.mxu0
    %v659 = vpop.f32.mrf.mxu0
    %v660 = vpop.f32.mrf.mxu0
    %661 = vdwg.mxu0
    %662 = vmatprep.subr.bf16.mxu0 0
    %663 = vmatpush1.bf16.msra.mxu0 %v493
    %664 = vmatprep.subr.bf16.mxu0 0
    %665 = vmatpush1.bf16.msra.mxu0 %v492
    %666 = vmatprep.subr.bf16.mxu0 0
    %667 = vmatpush1.bf16.msra.mxu0 %v491
    %668 = vmatprep.subr.bf16.mxu0 0
    %669 = vmatpush1.bf16.msra.mxu0 %v490
    %670 = vmatprep.subr.bf16.mxu0 0
    %671 = vmatpush1.bf16.msra.mxu0 %v489
    %672 = vmatprep.subr.bf16.mxu0 0
    %673 = vmatpush1.bf16.msra.mxu0 %v488
    %674 = vmatprep.subr.bf16.mxu0 0
    %675 = vmatpush1.bf16.msra.mxu0 %v487
    %676 = vmatprep.subr.bf16.mxu0 0
    %677 = vmatpush1.bf16.msra.mxu0 %v486
    %678 = vmatprep.subr.bf16.mxu0 0
    %679 = vmatpush2.bf16.msra.mxu0 %v501
    %680 = vmatprep.subr.bf16.mxu0 0
    %681 = vmatpush2.bf16.msra.mxu0 %v500
    %682 = vmatprep.subr.bf16.mxu0 0
    %683 = vmatpush2.bf16.msra.mxu0 %v499
    %684 = vmatprep.subr.bf16.mxu0 0
    %685 = vmatpush2.bf16.msra.mxu0 %v498
    %686 = vmatprep.subr.bf16.mxu0 0
    %687 = vmatpush2.bf16.msra.mxu0 %v497
    %688 = vmatprep.subr.bf16.mxu0 0
    %689 = vmatpush2.bf16.msra.mxu0 %v496
    %690 = vmatprep.subr.bf16.mxu0 0
    %691 = vmatpush2.bf16.msra.mxu0 %v495
    %692 = vmatprep.subr.bf16.mxu0 0
    %693 = vmatpush2.bf16.msra.mxu0 %v494
    %694 = vmatprep.mubr.bf16.mxu0 %v67
    %695 = vmatmul.mubr.bf16.gmra.mxu0 %v66
    %v696 = vpop.f32.mrf.mxu0
    %v697 = vadd.f32 %v657, %v696
    %v698 = vpop.f32.mrf.mxu0
    %v699 = vpop.f32.mrf.mxu0
    %v700 = vpop.f32.mrf.mxu0
    %701 = vdwg.mxu0
    %702 = vmatprep.subr.bf16.mxu0 0
    %703 = vmatpush1.bf16.msra.mxu0 %v509
    %704 = vmatprep.subr.bf16.mxu0 0
    %705 = vmatpush1.bf16.msra.mxu0 %v508
    %706 = vmatprep.subr.bf16.mxu0 0
    %707 = vmatpush1.bf16.msra.mxu0 %v507
    %708 = vmatprep.subr.bf16.mxu0 0
    %709 = vmatpush1.bf16.msra.mxu0 %v506
    %710 = vmatprep.subr.bf16.mxu0 0
    %711 = vmatpush1.bf16.msra.mxu0 %v505
    %712 = vmatprep.subr.bf16.mxu0 0
    %713 = vmatpush1.bf16.msra.mxu0 %v504
    %714 = vmatprep.subr.bf16.mxu0 0
    %715 = vmatpush1.bf16.msra.mxu0 %v503
    %716 = vmatprep.subr.bf16.mxu0 0
    %717 = vmatpush1.bf16.msra.mxu0 %v502
    %718 = vmatprep.subr.bf16.mxu0 0
    %719 = vmatpush2.bf16.msra.mxu0 %v517
    %720 = vmatprep.subr.bf16.mxu0 0
    %721 = vmatpush2.bf16.msra.mxu0 %v516
    %722 = vmatprep.subr.bf16.mxu0 0
    %723 = vmatpush2.bf16.msra.mxu0 %v515
    %724 = vmatprep.subr.bf16.mxu0 0
    %725 = vmatpush2.bf16.msra.mxu0 %v514
    %726 = vmatprep.subr.bf16.mxu0 0
    %727 = vmatpush2.bf16.msra.mxu0 %v513
    %728 = vmatprep.subr.bf16.mxu0 0
    %729 = vmatpush2.bf16.msra.mxu0 %v512
    %730 = vmatprep.subr.bf16.mxu0 0
    %731 = vmatpush2.bf16.msra.mxu0 %v511
    %732 = vmatprep.subr.bf16.mxu0 0
    %733 = vmatpush2.bf16.msra.mxu0 %v510
    %734 = vmatprep.mubr.bf16.mxu0 %v69
    %735 = vmatmul.mubr.bf16.gmra.mxu0 %v68
    %v736 = vpop.f32.mrf.mxu0
    %v737 = vadd.f32 %v697, %v736
    %v738 = vpop.f32.mrf.mxu0
    %v739 = vpop.f32.mrf.mxu0
    %v740 = vpop.f32.mrf.mxu0
    %741 = vdwg.mxu0
    %vm742 = vcmask 1043456
    %v743 = vsel %vm742, %v737, 0.0
    %v744 = vrot.slane %v743, 4
    %v745 = vadd.f32 %v743, %v744
    %v746 = vrot.slane %v745, 2
    %v747 = vadd.f32 %v745, %v746
    %v748 = vrot.slane %v747, 1
    %v749 = vadd.f32 %v747, %v748
    %v750 = vmul.f32 %v749, 0.25
    %v751 = vmul.f32 %v737, %v737
    %v752 = vsel %vm742, %v751, 0.0
    %v753 = vrot.slane %v752, 4
    %v754 = vadd.f32 %v752, %v753
    %v755 = vrot.slane %v754, 2
    %v756 = vadd.f32 %v754, %v755
    %v757 = vrot.slane %v756, 1
    %v758 = vadd.f32 %v756, %v757
    %v759 = vmul.f32 %v758, 0.25
    %v760 = vmul.f32 %v750, %v750
    %v761 = vsub.f32 %v759, %v760
    %v762 = vmax.f32 %v761, 0.0
    %v763 = vld [vmem:[%s2] sm:$0x1]
    %v764 = vld [vmem:[%s2 + $0x1] sm:$0x1]
    %v765 = vld [vmem:[%s2 + $0x2] sm:$0x1]
    %v766 = vld [vmem:[#allocation4] sm:$0xff]
    %v767 = vld [vmem:[#allocation4 + $0x8] sm:$0xff]
    %v768 = vld [vmem:[#allocation4 + $0x10] sm:$0xff]
    %v769 = vld [vmem:[#allocation4 + $0x18] sm:$0xff]
    %v770 = vld [vmem:[#allocation4 + $0x20] sm:$0xff]
    %v771 = vld [vmem:[#allocation4 + $0x28] sm:$0xff]
    %v772 = vld [vmem:[#allocation4 + $0x30] sm:$0xff]
    %v773 = vld [vmem:[#allocation4 + $0x38] sm:$0xff]
    %v774 = vld [vmem:[#allocation4 + $0x40] sm:$0xff]
    %v775 = vld [vmem:[#allocation4 + $0x48] sm:$0xff]
    %v776 = vld [vmem:[#allocation4 + $0x50] sm:$0xff]
    %v777 = vld [vmem:[#allocation4 + $0x58] sm:$0xff]
    %v778 = vld [vmem:[#allocation4 + $0x60] sm:$0xff]
    %v779 = vld [vmem:[#allocation4 + $0x68] sm:$0xff]
    %v780 = vld [vmem:[#allocation4 + $0x70] sm:$0xff]
    %v781 = vld [vmem:[#allocation4 + $0x78] sm:$0xff]
    %v782 = vadd.f32 %v762, 1e-05
    %v783 = vrsqrt.pop %v782
    %v784 = vmul.f32 %v763, %v783
    %v785 = vmul.f32 %v750, %v784
    %v786 = vsub.f32 %v764, %v785
    %v787 = vlaneseq
    %v788 = vshrl.u32 %v787, 7
    %v789 = vsub.s32 0, %v788
    %v790 = vrot.slane %v784, %v789
    %v791 = vmul.f32 %v737, %v790
    %v792 = vlaneseq
    %v793 = vshrl.u32 %v792, 7
    %v794 = vsub.s32 0, %v793
    %v795 = vrot.slane %v786, %v794
    %v796 = vadd.f32 %v791, %v795
    %vm797 = vcmp.ge.f32.partialorder %v796, 0.0
    %v798 = vmul.f32 %v796, 0.1
    %v799 = vsel %vm797, %v796, %v798
    %v800 = vlaneseq
    %v801 = vshrl.u32 %v800, 7
    %v802 = vsub.s32 0, %v801
    %v803 = vrot.slane %v765, %v802
    %804 = vmatprep.subr.mxu0 0.0
    %805 = vmatpush1.msra.mxu0 %v781
    %806 = vmatprep.subr.mxu0 0.0
    %807 = vmatpush1.msra.mxu0 %v780
    %808 = vmatprep.subr.mxu0 0.0
    %809 = vmatpush1.msra.mxu0 %v779
    %810 = vmatprep.subr.mxu0 0.0
    %811 = vmatpush1.msra.mxu0 %v778
    %812 = vmatprep.subr.mxu0 0.0
    %813 = vmatpush1.msra.mxu0 %v777
    %814 = vmatprep.subr.mxu0 0.0
    %815 = vmatpush1.msra.mxu0 %v776
    %816 = vmatprep.subr.mxu0 0.0
    %817 = vmatpush1.msra.mxu0 %v775
    %818 = vmatprep.subr.mxu0 0.0
    %819 = vmatpush1.msra.mxu0 %v774
    %820 = vmatprep.subr.mxu0 0.0
    %821 = vmatpush1.msra.mxu0 %v773
    %822 = vmatprep.subr.mxu0 0.0
    %823 = vmatpush1.msra.mxu0 %v772
    %824 = vmatprep.subr.mxu0 0.0
    %825 = vmatpush1.msra.mxu0 %v771
    %826 = vmatprep.subr.mxu0 0.0
    %827 = vmatpush1.msra.mxu0 %v770
    %828 = vmatprep.subr.mxu0 0.0
    %829 = vmatpush1.msra.mxu0 %v769
    %830 = vmatprep.subr.mxu0 0.0
    %831 = vmatpush1.msra.mxu0 %v768
    %832 = vmatprep.subr.mxu0 0.0
    %833 = vmatpush1.msra.mxu0 %v767
    %834 = vmatprep.subr.mxu0 0.0
    %835 = vmatpush1.msra.mxu0 %v766
    %836 = vmatprep.subr.mxu0 0.0
    %837 = vmatpush2.msra.mxu0 0.0
    %838 = vmatprep.subr.mxu0 0.0
    %839 = vmatpush2.msra.mxu0 0.0
    %840 = vmatprep.subr.mxu0 0.0
    %841 = vmatpush2.msra.mxu0 0.0
    %842 = vmatprep.subr.mxu0 0.0
    %843 = vmatpush2.msra.mxu0 0.0
    %844 = vmatprep.subr.mxu0 0.0
    %845 = vmatpush2.msra.mxu0 0.0
    %846 = vmatprep.subr.mxu0 0.0
    %847 = vmatpush2.msra.mxu0 0.0
    %848 = vmatprep.subr.mxu0 0.0
    %849 = vmatpush2.msra.mxu0 0.0
    %850 = vmatprep.subr.mxu0 0.0
    %851 = vmatpush2.msra.mxu0 0.0
    %852 = vmatprep.subr.mxu0 0.0
    %853 = vmatpush2.msra.mxu0 0.0
    %854 = vmatprep.subr.mxu0 0.0
    %855 = vmatpush2.msra.mxu0 0.0
    %856 = vmatprep.subr.mxu0 0.0
    %857 = vmatpush2.msra.mxu0 0.0
    %858 = vmatprep.subr.mxu0 0.0
    %859 = vmatpush2.msra.mxu0 0.0
    %860 = vmatprep.subr.mxu0 0.0
    %861 = vmatpush2.msra.mxu0 0.0
    %862 = vmatprep.subr.mxu0 0.0
    %863 = vmatpush2.msra.mxu0 0.0
    %864 = vmatprep.subr.mxu0 0.0
    %865 = vmatpush2.msra.mxu0 0.0
    %866 = vmatprep.subr.mxu0 0.0
    %867 = vmatpush2.msra.mxu0 0.0
    %868 = vmatprep.mubr.f32.mxu0 0.0
    %869 = vmatmul.mubr.f32.gmra.mxu0 %v799
    %v870 = vpop.f32.mrf.mxu0
    %v871 = vadd.f32 %v803, %v870
    %v872 = vpop.f32.mrf.mxu0
    %873 = vdwg.mxu0
    %v874 = vlaneseq
    %v875 = vand.u32 %v874, 127
    %vm876 = vcmp.ge.s32.totalorder %v875, 5
    %vm877 = vcmp.lt.s32.totalorder %v875, 7
    %vm878 = vmand %vm876, %vm877
    %v879 = vmul.f32 %v871, 1.442695
    %v880 = vpow.pop %v879
    %v881 = vsel %vm878, %v880, %v871
    %882 = vst [vmem:[%s4] sm:$0xf] %v881
    // Predicated region
    $region26: #{q_fc_forward.1} parent=1 // pred_check
      _
    $region27: #{q_fc_forward.1} parent=1 // pred_check_branch
      %884 = sbr.rel (0) target = $region29
    $region28: #{q_fc_forward.1} parent=1 // pred_region
      _
    $region29: #{q_fc_forward.1} parent=1 // pred_fallthru
      _
    // Predicated region
    $region30: #{q_fc_forward.1} parent=1 // pred_check
      _
    $region31: #{q_fc_forward.1} parent=1 // pred_check_branch
      %886 = sbr.rel (0) target = $region33
    $region32: #{q_fc_forward.1} parent=1 // pred_region
      _
    $region33: #{q_fc_forward.1} parent=1 // pred_fallthru
      _
    %887 = vsyncpa [#allocation3], 1
    %888 = vsyncpa [#allocation5], 1

</llo_original>
